<compile_context>
chip_gen: v6e
topology: v6e:2x2x1
jax: 0.10.0
libtpu: 0.0.40
codegen_flags: <defaults>
</compile_context>

<pallas_src>
import functools

import jax
import jax.numpy as jnp
from jax.experimental import pallas as pl
from jax.experimental.pallas import tpu as pltpu


def _round_up(x, m):
    return (x + m - 1) // m * m


def _linear_kernel(x_ref, w_ref, b_ref, o_ref, acc_ref):
    """One (tile_n, k_tile) x (k_tile, H) MXU step of y = x @ W + b."""
    k = pl.program_id(1)

    @pl.when(k == 0)
    def _():
        acc_ref[...] = jnp.zeros_like(acc_ref)

    # f32 activations arrive untouched; cast to bf16 on the VPU (hidden under
    # the MXU) so the matmul runs bf16 x bf16 with f32 accumulation.
    x_bf16 = x_ref[...].astype(jnp.bfloat16)
    acc_ref[...] += jnp.dot(x_bf16, w_ref[...],
                            preferred_element_type=jnp.float32)

    @pl.when(k == pl.num_programs(1) - 1)
    def _():
        o_ref[...] = (acc_ref[...] + b_ref[...]).astype(o_ref.dtype)


def _pick_tile_n(n_rows):
    # Small / medium batches: one block spanning the whole batch (block ==
    # full array dim is legal for any n; no padding, no post-kernel slice).
    if n_rows <= 512:
        return n_rows
    # Large batches: 256-aligned tiles feed the 2x256^2 MXU (v6e/v7x), are a
    # multiple of v5e's 128x128 MXU height, and guarantee >= 2 grid steps so
    # both v7x TensorCores get work via dimension_semantics.
    # TODO(synk): per-generation tuning (v5e: 128, v6e: up to 512) via
    # pltpu.get_tpu_info() if this path becomes hot.
    return 256


@functools.partial(jax.jit, static_argnames=("h", "k_tile"))
def _linear_pallas(x, w_p, b_p, *, h, k_tile):
    """y = x @ W + b with W pre-padded / pre-cast to bf16, shape (d_pad, h_out)."""
    n, d = x.shape
    d_pad, h_out = w_p.shape

    tile_n = _pick_tile_n(n)
    n_pad = _round_up(n, tile_n)

    # Pad activations only if D (or a large, misaligned N) actually needs it.
    if n_pad != n or d_pad != d:
        x = jnp.pad(x, ((0, n_pad - n), (0, d_pad - d)))

    grid = (n_pad // tile_n, d_pad // k_tile)

    cost = pl.CostEstimate(
        flops=2 * n_pad * d_pad * h_out,
        transcendentals=0,
        bytes_accessed=(4 * n_pad * d_pad        # x (f32)
                        + 2 * d_pad * h_out      # W (bf16)
                        + 4 * h_out              # bias (f32)
                        + 4 * n_pad * h_out),    # y (f32)
    )

    y = pl.pallas_call(
        _linear_kernel,
        out_shape=jax.ShapeDtypeStruct((n_pad, h_out), x.dtype),
        grid_spec=pltpu.PrefetchScalarGridSpec(
            num_scalar_prefetch=0,
            grid=grid,
            in_specs=[
                # Activations: tiled over batch, streamed over K.
                pl.BlockSpec((tile_n, k_tile), lambda i, k: (i, k)),
                # Weight: bf16, K-streamed (never fully resident in VMEM).
                pl.BlockSpec((k_tile, h_out), lambda i, k: (k, 0)),
                # Bias: tiny constant block.
                pl.BlockSpec((1, h_out), lambda i, k: (0, 0)),
            ],
            out_specs=pl.BlockSpec((tile_n, h_out), lambda i, k: (i, 0)),
            scratch_shapes=[pltpu.VMEM((tile_n, h_out), jnp.float32)],
        ),
        compiler_params=pltpu.CompilerParams(
            dimension_semantics=("parallel", "arbitrary"),
            vmem_limit_bytes=32 * 1024 * 1024,
        ),
        cost_estimate=cost,
    )(x, w_p, b_p)

    if n_pad != n or h_out != h:
        # Only materialized when padding was actually required (not at the
        # test shapes below).
        y = y[:n, :h]
    return y


class PallasPassThroughLinear:
    """PassThroughWrapper(nn.Linear(D, H)) with the Linear as a Pallas kernel.

    Parameter prep (pad + bf16 cast) happens once here, NOT per forward call.
    """

    def __init__(self, weight, bias, *, k_tile=512):
        # weight: (D, H) f32 (already transposed vs torch's (H, D)); bias: (H,)
        d, h = weight.shape
        k_tile = min(k_tile, _round_up(d, 128))
        d_pad = _round_up(d, k_tile)
        # Keep H unpadded when small (<=128); lane-pad only genuinely wide H.
        h_out = h if h <= 128 else _round_up(h, 128)

        # Zero-padding D is exact for the matmul (zero cols of x hit zero
        # rows of W); padded H cols (if any) are sliced away after the call.
        self.w_p = jnp.pad(
            weight, ((0, d_pad - d), (0, h_out - h))).astype(jnp.bfloat16)
        self.b_p = jnp.pad(
            bias, (0, h_out - h)).astype(jnp.float32).reshape(1, h_out)
        self.h = h
        self.k_tile = k_tile

    def __call__(self, args):
        # TODO(synk): the wrapped `module` is arbitrary in the PyTorch source;
        # only the canonical nn.Linear case is implemented as a kernel.
        y = _linear_pallas(args[0], self.w_p, self.b_p,
                           h=self.h, k_tile=self.k_tile)
        return (y, *args[1:])


if __name__ == "__main__":
    # Small shapes consistent with the module: a 2D activation for the inner
    # Linear plus an extra tensor that must be passed through unchanged.
    N, D, HIDDEN = 2, 256, 32

    key = jax.random.PRNGKey(0)
    kx, kw, kb, ke = jax.random.split(key, 4)

    x = jax.random.normal(kx, (N, D), dtype=jnp.float32)
    extra = jax.random.normal(ke, (N, 8), dtype=jnp.float32)
    # Deterministic synthetic Linear parameters (not a checkpoint load).
    weight = jax.random.normal(kw, (D, HIDDEN), dtype=jnp.float32) * (1.0 / (D ** 0.5))
    bias = jax.random.normal(kb, (HIDDEN,), dtype=jnp.float32) * 0.01

    wrapper = PallasPassThroughLinear(weight, bias)
    out = wrapper((x, extra))
    out = jax.tree_util.tree_map(jax.block_until_ready, out)
    y, extra_out = out

    # Reference: plain JAX with the same bf16-operand / f32-accum math, plus
    # a looser check against the full-f32 nn.Linear semantics.
    ref_bf16 = jnp.dot(x.astype(jnp.bfloat16), weight.astype(jnp.bfloat16),
                       preferred_element_type=jnp.float32) + bias
    ref_f32 = x @ weight + bias

    assert y.shape == (N, HIDDEN)
    assert y.dtype == jnp.float32
    assert jnp.allclose(y, ref_bf16, atol=1e-3, rtol=1e-3)
    assert jnp.allclose(y, ref_f32, atol=5e-2, rtol=5e-2)
    # Pass-through elements must come back untouched.
    assert jnp.array_equal(extra_out, extra)

    print("KERNEL_OK")
</pallas_src>

<mosaic_0001>
module attributes {stable_mosaic.version = 11 : i64} {
  func.func @_linear_kernel(%arg0: i32, %arg1: i32, %arg2: memref<2x256xf32, #tpu.memory_space<vmem>>, %arg3: memref<256x32xbf16, #tpu.memory_space<vmem>>, %arg4: memref<1x32xf32, #tpu.memory_space<vmem>>, %arg5: memref<2x32xf32, #tpu.memory_space<vmem>>, %arg6: memref<2x32xf32, #tpu.memory_space<vmem>>) attributes {dimension_semantics = [#tpu.dimension_semantics<parallel>, #tpu.dimension_semantics<arbitrary>], iteration_bounds = array<i64: 1, 1>, scalar_prefetch = 0 : i64, scratch_operands = 1 : i64, tpu.core_type = #tpu.core_type<tc>, window_params = [{transform_indices = @transform_0, window_bounds = array<i64: 2, 256>}, {transform_indices = @transform_1, window_bounds = array<i64: 256, 32>}, {pipeline_mode = #tpu.pipeline_mode<synchronous>, transform_indices = @transform_2, window_bounds = array<i64: 1, 32>}, {transform_indices = @transform_3, window_bounds = array<i64: 2, 32>}]} {
    %c0_i32 = arith.constant 0 : i32
    %0 = arith.cmpi eq, %arg1, %c0_i32 : i32
    %1 = arith.extui %0 : i1 to i32
    %c0_i32_0 = arith.constant 0 : i32
    %2 = arith.cmpi ne, %1, %c0_i32_0 : i32
    scf.if %2 {
      %cst_10 = arith.constant 0.000000e+00 : f32
      %13 = vector.broadcast %cst_10 : f32 to vector<2x32xf32>
      %c0_11 = arith.constant 0 : index
      %c0_12 = arith.constant 0 : index
      %14 = vector.load %arg6[%c0_11, %c0_12] : memref<2x32xf32, #tpu.memory_space<vmem>>, vector<2x32xf32>
      tpu.vector_store %arg6[%c0_11, %c0_12], %13 {strides = array<i32>} : memref<2x32xf32, #tpu.memory_space<vmem>>, vector<2x32xf32>,
    } else {
    }
    %c0 = arith.constant 0 : index
    %c0_1 = arith.constant 0 : index
    %3 = vector.load %arg2[%c0, %c0_1] : memref<2x256xf32, #tpu.memory_space<vmem>>, vector<2x256xf32>
    %4 = arith.truncf %3 : vector<2x256xf32> to vector<2x256xbf16>
    %c0_2 = arith.constant 0 : index
    %c0_3 = arith.constant 0 : index
    %5 = vector.load %arg6[%c0_2, %c0_3] : memref<2x32xf32, #tpu.memory_space<vmem>>, vector<2x32xf32>
    %c0_4 = arith.constant 0 : index
    %c0_5 = arith.constant 0 : index
    %6 = vector.load %arg3[%c0_4, %c0_5] : memref<256x32xbf16, #tpu.memory_space<vmem>>, vector<256x32xbf16>
    %cst = arith.constant dense<0.000000e+00> : vector<2x32xf32>
    %7 = tpu.matmul %4, %6, %cst {dimension_numbers = #tpu.dot_dimension_numbers<[1], [0], [0], [1], [0, 0, 1, 1], [], []>} : vector<2x256xbf16>, vector<256x32xbf16>, vector<2x32xf32> -> vector<2x32xf32>
    %8 = arith.addf %5, %7 : vector<2x32xf32>
    %c0_6 = arith.constant 0 : index
    %c0_7 = arith.constant 0 : index
    %9 = vector.load %arg6[%c0_6, %c0_7] : memref<2x32xf32, #tpu.memory_space<vmem>>, vector<2x32xf32>
    tpu.vector_store %arg6[%c0_6, %c0_7], %8 {strides = array<i32>} : memref<2x32xf32, #tpu.memory_space<vmem>>, vector<2x32xf32>,
    %c0_i32_8 = arith.constant 0 : i32
    %10 = arith.cmpi eq, %arg1, %c0_i32_8 : i32
    %11 = arith.extui %10 : i1 to i32
    %c0_i32_9 = arith.constant 0 : i32
    %12 = arith.cmpi ne, %11, %c0_i32_9 : i32
    scf.if %12 {
      %c0_10 = arith.constant 0 : index
      %c0_11 = arith.constant 0 : index
      %13 = vector.load %arg6[%c0_10, %c0_11] : memref<2x32xf32, #tpu.memory_space<vmem>>, vector<2x32xf32>
      %c0_12 = arith.constant 0 : index
      %c0_13 = arith.constant 0 : index
      %14 = vector.load %arg4[%c0_12, %c0_13] : memref<1x32xf32, #tpu.memory_space<vmem>>, vector<1x32xf32>
      %15 = vector.broadcast %14 : vector<1x32xf32> to vector<2x32xf32>
      %16 = arith.addf %13, %15 : vector<2x32xf32>
      %c0_14 = arith.constant 0 : index
      %c0_15 = arith.constant 0 : index
      %17 = vector.load %arg5[%c0_14, %c0_15] : memref<2x32xf32, #tpu.memory_space<vmem>>, vector<2x32xf32>
      tpu.vector_store %arg5[%c0_14, %c0_15], %16 {strides = array<i32>} : memref<2x32xf32, #tpu.memory_space<vmem>>, vector<2x32xf32>,
    } else {
    }
    return
  }
  func.func @transform_0(%arg0: i32, %arg1: i32) -> (i32, i32) {
    %c0_i32 = arith.constant 0 : i32
    return %arg0, %arg1 : i32, i32
  }
  func.func @transform_1(%arg0: i32, %arg1: i32) -> (i32, i32) {
    %c0_i32 = arith.constant 0 : i32
    %c0_i32_0 = arith.constant 0 : i32
    return %arg1, %c0_i32 : i32, i32
  }
  func.func @transform_2(%arg0: i32, %arg1: i32) -> (i32, i32) {
    %c0_i32 = arith.constant 0 : i32
    %c0_i32_0 = arith.constant 0 : i32
    %c0_i32_1 = arith.constant 0 : i32
    return %c0_i32, %c0_i32_0 : i32, i32
  }
  func.func @transform_3(%arg0: i32, %arg1: i32) -> (i32, i32) {
    %c0_i32 = arith.constant 0 : i32
    %c0_i32_0 = arith.constant 0 : i32
    return %arg0, %c0_i32 : i32, i32
  }
}

</mosaic_0001>

<llo_original>
// kernel: _linear_pallas.1
$region0: #{_linear_pallas.1}
  #allocation0 [shape = 'u32[]', space=smem, size = 0x4, offset = 0x4, fixed_abs, tag = 'smem constant byte address 0x4 - core index']
  #allocation1 [shape = 'u32[144,128]{1,0:T(1,128)}', space=vmem, size = 0x12000, scoped, tag = 'internal scratch']
  #allocation2 [shape = 'f32[2,32]{1,0:T(2,128)}', space=vmem, size = 0x400, scoped, tag = 'scratch operand']
  %s0 = inlined_call_operand.vmem [shape: f32[2,256], index: 0, kind: input, shape index: {}]
  %s1 = inlined_call_operand.vmem [shape: bf16[256,32], index: 1, kind: input, shape index: {}]
  %s2 = inlined_call_operand.vmem [shape: f32[1,32], index: 2, kind: input, shape index: {}]
  %s3 = inlined_call_operand.hbm [shape: f32[2,32], index: 3, kind: output, shape index: {}]
  %s4 = sld [smem:[#allocation0]]
  $region30: #{_linear_pallas.1} parent=0
    _
  %s6 = ssub.s32 1, %s4
  %s7 = scalar_select 0, %s6, %s4
  $region1: #{_linear_pallas.1} parent=0
    #allocation3 [shape = 'u8[1024]{0}', space=vmem, size = 0x400, scoped, tag = 'output window, operand 0, single buffered']
    #allocation4 [shape = 's32[1]{0}', space=sflag, size = 0x4, scoped, tag = 'scoped memory for _linear_pallas.1']
    %8 = vsyncpa [#allocation4], 0
    // Predicated region
    $region2: #{_linear_pallas.1} parent=1 // pred_check
      _
    $region3: #{_linear_pallas.1} parent=1 // pred_check_branch
      %10 = sbr.rel (0) target = $region5
    $region4: #{_linear_pallas.1} parent=1 // pred_region
      _
    $region5: #{_linear_pallas.1} parent=1 // pred_fallthru
      _
    // Predicated region
    $region6: #{_linear_pallas.1} parent=1 // pred_check
      _
    $region7: #{_linear_pallas.1} parent=1 // pred_check_branch
      %12 = sbr.rel (0) target = $region9
    $region8: #{_linear_pallas.1} parent=1 // pred_region
      _
    $region9: #{_linear_pallas.1} parent=1 // pred_fallthru
      _
    // Predicated region
    $region10: #{_linear_pallas.1} parent=1 // pred_check
      _
    $region11: #{_linear_pallas.1} parent=1 // pred_check_branch
      %14 = sbr.rel (0) target = $region13
    $region12: #{_linear_pallas.1} parent=1 // pred_region
      _
    $region13: #{_linear_pallas.1} parent=1 // pred_fallthru
      _
    %p16 = scmp.eq.s32.totalorder 0, 0
    // Predicated region
    $region14: #{_linear_pallas.1} parent=1 // pred_check
      %p17 = pneg %p16
    $region15: #{_linear_pallas.1} parent=1 // pred_check_branch
      %19 = sbr.rel (%p17) target = $region17
    $region16: #{_linear_pallas.1} parent=1 // pred_region
      %vm20 = vcmask 254976
      %21 = vst.msk [vmem:[#allocation2] sm:$0x3] %vm20, 0.0
    $region17: #{_linear_pallas.1} parent=1 // pred_fallthru
      _
    %v22 = vld [vmem:[%s0] sm:$0xf]
    %v25 = vunpack.c.l.s4 1983009808
    %v26 = vunpack.c.0.s8 %v25
    %v27 = vlaneseq
    %v28 = vshrl.u32 %v27, 7
    %v29 = vsub.s32 %v26, %v28
    %v30 = vrot.slane %v22, %v29
    %v31 = vcombine.high %v30, %v30
    %v34 = vpack.c.bf16 %v30, %v30
    %v35 = vpack.c.bf16 %v31, %v31
    %v36 = vld [vmem:[#allocation2] sm:$0x3]
    %v37 = vld [vmem:[%s1] sm:$0xf]
    %v38 = vld [vmem:[%s1 + $0x4] sm:$0xf]
    %v39 = vld [vmem:[%s1 + $0x8] sm:$0xf]
    %v40 = vld [vmem:[%s1 + $0xc] sm:$0xf]
    %v41 = vld [vmem:[%s1 + $0x10] sm:$0xf]
    %v42 = vld [vmem:[%s1 + $0x14] sm:$0xf]
    %v43 = vld [vmem:[%s1 + $0x18] sm:$0xf]
    %v44 = vld [vmem:[%s1 + $0x1c] sm:$0xf]
    %v45 = vld [vmem:[%s1 + $0x20] sm:$0xf]
    %v46 = vld [vmem:[%s1 + $0x24] sm:$0xf]
    %v47 = vld [vmem:[%s1 + $0x28] sm:$0xf]
    %v48 = vld [vmem:[%s1 + $0x2c] sm:$0xf]
    %v49 = vld [vmem:[%s1 + $0x30] sm:$0xf]
    %v50 = vld [vmem:[%s1 + $0x34] sm:$0xf]
    %v51 = vld [vmem:[%s1 + $0x38] sm:$0xf]
    %v52 = vld [vmem:[%s1 + $0x3c] sm:$0xf]
    %v53 = vld [vmem:[%s1 + $0x40] sm:$0xf]
    %v54 = vld [vmem:[%s1 + $0x44] sm:$0xf]
    %v55 = vld [vmem:[%s1 + $0x48] sm:$0xf]
    %v56 = vld [vmem:[%s1 + $0x4c] sm:$0xf]
    %v57 = vld [vmem:[%s1 + $0x50] sm:$0xf]
    %v58 = vld [vmem:[%s1 + $0x54] sm:$0xf]
    %v59 = vld [vmem:[%s1 + $0x58] sm:$0xf]
    %v60 = vld [vmem:[%s1 + $0x5c] sm:$0xf]
    %v61 = vld [vmem:[%s1 + $0x60] sm:$0xf]
    %v62 = vld [vmem:[%s1 + $0x64] sm:$0xf]
    %v63 = vld [vmem:[%s1 + $0x68] sm:$0xf]
    %v64 = vld [vmem:[%s1 + $0x6c] sm:$0xf]
    %v65 = vld [vmem:[%s1 + $0x70] sm:$0xf]
    %v66 = vld [vmem:[%s1 + $0x74] sm:$0xf]
    %v67 = vld [vmem:[%s1 + $0x78] sm:$0xf]
    %v68 = vld [vmem:[%s1 + $0x7c] sm:$0xf]
    %v101 = vunpack.c.l.b16 %v37
    %v102 = vunpack.c.l.b16 %v38
    %v103 = vunpack.c.l.b16 %v39
    %v104 = vunpack.c.l.b16 %v40
    %v105 = vunpack.c.l.b16 %v41
    %v106 = vunpack.c.l.b16 %v42
    %v107 = vunpack.c.l.b16 %v43
    %v108 = vunpack.c.l.b16 %v44
    %v109 = vunpack.c.l.b16 %v45
    %v110 = vunpack.c.l.b16 %v46
    %v111 = vunpack.c.l.b16 %v47
    %v112 = vunpack.c.l.b16 %v48
    %v113 = vunpack.c.l.b16 %v49
    %v114 = vunpack.c.l.b16 %v50
    %v115 = vunpack.c.l.b16 %v51
    %v116 = vunpack.c.l.b16 %v52
    %v117 = vunpack.c.l.b16 %v53
    %v118 = vunpack.c.l.b16 %v54
    %v119 = vunpack.c.l.b16 %v55
    %v120 = vunpack.c.l.b16 %v56
    %v121 = vunpack.c.l.b16 %v57
    %v122 = vunpack.c.l.b16 %v58
    %v123 = vunpack.c.l.b16 %v59
    %v124 = vunpack.c.l.b16 %v60
    %v125 = vunpack.c.l.b16 %v61
    %v126 = vunpack.c.l.b16 %v62
    %v127 = vunpack.c.l.b16 %v63
    %v128 = vunpack.c.l.b16 %v64
    %v129 = vunpack.c.l.b16 %v65
    %v130 = vunpack.c.l.b16 %v66
    %v131 = vunpack.c.l.b16 %v67
    %v132 = vunpack.c.l.b16 %v68
    %v133 = vpack.c.b16 %v102, %v101
    %v134 = vpack.c.b16 %v104, %v103
    %v135 = vpack.c.b16 %v106, %v105
    %v136 = vpack.c.b16 %v108, %v107
    %v137 = vpack.c.b16 %v110, %v109
    %v138 = vpack.c.b16 %v112, %v111
    %v139 = vpack.c.b16 %v114, %v113
    %v140 = vpack.c.b16 %v116, %v115
    %v141 = vpack.c.b16 %v118, %v117
    %v142 = vpack.c.b16 %v120, %v119
    %v143 = vpack.c.b16 %v122, %v121
    %v144 = vpack.c.b16 %v124, %v123
    %v145 = vpack.c.b16 %v126, %v125
    %v146 = vpack.c.b16 %v128, %v127
    %v147 = vpack.c.b16 %v130, %v129
    %v148 = vpack.c.b16 %v132, %v131
    %165 = vmatprep.subr.bf16.mxu0 0
    %166 = vmatpush1.bf16.msra.mxu0 %v140
    %167 = vmatprep.subr.bf16.mxu0 0
    %168 = vmatpush1.bf16.msra.mxu0 %v139
    %169 = vmatprep.subr.bf16.mxu0 0
    %170 = vmatpush1.bf16.msra.mxu0 %v138
    %171 = vmatprep.subr.bf16.mxu0 0
    %172 = vmatpush1.bf16.msra.mxu0 %v137
    %173 = vmatprep.subr.bf16.mxu0 0
    %174 = vmatpush1.bf16.msra.mxu0 %v136
    %175 = vmatprep.subr.bf16.mxu0 0
    %176 = vmatpush1.bf16.msra.mxu0 %v135
    %177 = vmatprep.subr.bf16.mxu0 0
    %178 = vmatpush1.bf16.msra.mxu0 %v134
    %179 = vmatprep.subr.bf16.mxu0 0
    %180 = vmatpush1.bf16.msra.mxu0 %v133
    %181 = vmatprep.subr.bf16.mxu0 0
    %182 = vmatpush2.bf16.msra.mxu0 %v148
    %183 = vmatprep.subr.bf16.mxu0 0
    %184 = vmatpush2.bf16.msra.mxu0 %v147
    %185 = vmatprep.subr.bf16.mxu0 0
    %186 = vmatpush2.bf16.msra.mxu0 %v146
    %187 = vmatprep.subr.bf16.mxu0 0
    %188 = vmatpush2.bf16.msra.mxu0 %v145
    %189 = vmatprep.subr.bf16.mxu0 0
    %190 = vmatpush2.bf16.msra.mxu0 %v144
    %191 = vmatprep.subr.bf16.mxu0 0
    %192 = vmatpush2.bf16.msra.mxu0 %v143
    %193 = vmatprep.subr.bf16.mxu0 0
    %194 = vmatpush2.bf16.msra.mxu0 %v142
    %195 = vmatprep.subr.bf16.mxu0 0
    %196 = vmatpush2.bf16.msra.mxu0 %v141
    %197 = vmatprep.mubr.bf16.mxu0 %v35
    %198 = vmatmul.mubr.bf16.gmra.mxu0 %v34
    %v199 = vpop.f32.mrf.mxu0
    %v200 = vadd.f32 0.0, %v199
    %v201 = vpop.f32.mrf.mxu0
    %v202 = vpop.f32.mrf.mxu0
    %v203 = vpop.f32.mrf.mxu0
    %204 = vdwg.mxu0
    %v205 = vadd.f32 %v36, %v200
    %vm206 = vcmask 254976
    %207 = vst.msk [vmem:[#allocation2] sm:$0x3] %vm206, %v205
    // Predicated region
    $region18: #{_linear_pallas.1} parent=1 // pred_check
      %p208 = pneg %p16
    $region19: #{_linear_pallas.1} parent=1 // pred_check_branch
      %210 = sbr.rel (%p208) target = $region21
    $region20: #{_linear_pallas.1} parent=1 // pred_region
      %v211 = vld [vmem:[#allocation2] sm:$0x3]
      %v212 = vld [vmem:[%s2] sm:$0x1]
      %v214 = vlaneseq
      %v215 = vshrl.u32 %v214, 7
      %v216 = vsub.s32 0, %v215
      %v217 = vrot.slane %v212, %v216
      %v219 = vadd.f32 %v211, %v217
      %220 = vst.msk [vmem:[#allocation3] sm:$0x3] %vm206, %v219
    $region21: #{_linear_pallas.1} parent=1 // pred_fallthru
      _
    // Predicated region
    $region22: #{_linear_pallas.1} parent=1 // pred_check
      _
    $region23: #{_linear_pallas.1} parent=1 // pred_check_branch
      %222 = sbr.rel (0) target = $region25
    $region24: #{_linear_pallas.1} parent=1 // pred_region
      %s224 = ssub.s32 32, 32
      %225 = vsyncadd [#allocation4], %s224
      %s227 = sshll.u32 [#allocation3], 4
      %s228 = int_to_ptr.vmem [resolvable:$true] %s227
      %230 = dma.vmem_to_hbm [thread:$0]  %s228, 32, %s3, [#allocation4]
    $region25: #{_linear_pallas.1} parent=1 // pred_fallthru
      _
    // Predicated region
    $region26: #{_linear_pallas.1} parent=1 // pred_check
      _
    $region27: #{_linear_pallas.1} parent=1 // pred_check_branch
      %232 = sbr.rel (0) target = $region29
    $region28: #{_linear_pallas.1} parent=1 // pred_region
      %233 = dma.done [#allocation4], 32
    $region29: #{_linear_pallas.1} parent=1 // pred_fallthru
      _
    %234 = vsyncpa [#allocation4], 1

</llo_original>
